<compile_context>
chip_gen: v5e
topology: v5e:2x2
jax: 0.10.0
libtpu: 0.0.40
codegen_flags: <defaults>
</compile_context>

<pallas_src>
import functools

import jax
import jax.numpy as jnp
from jax.experimental import pallas as pl
from jax.experimental.pallas import tpu as pltpu


def _round_up(x, m):
    return (x + m - 1) // m * m


def _msa_transition_kernel(m_ref, gamma_ref, beta_ref, w1_ref, b1_ref,
                           w2_ref, b2_ref, o_ref, *, eps):
    """One row tile of: out = m + relu(LN(m) @ W1^T + b1) @ W2^T + b2."""
    x = m_ref[...].astype(jnp.float32)                        # [tm, c_m] f32

    # LayerNorm over the channel (lane) axis, f32 statistics, EUP rsqrt.
    mean = jnp.mean(x, axis=-1, keepdims=True)
    centered = x - mean
    var = jnp.mean(centered * centered, axis=-1, keepdims=True)
    inv = jax.lax.rsqrt(var + eps)
    xn = centered * inv * gamma_ref[...] + beta_ref[...]      # f32

    # Linear 1 (c_m -> hidden) + ReLU.  Low-precision MXU operands,
    # f32 accumulation; weights arrive pre-cast to the compute dtype.
    h = jnp.dot(xn.astype(w1_ref.dtype), w1_ref[...],
                preferred_element_type=jnp.float32) + b1_ref[...]
    h = jnp.maximum(h, 0.0)

    # Linear 2 (hidden -> c_m) + residual (residual kept in f32).
    y = jnp.dot(h.astype(w2_ref.dtype), w2_ref[...],
                preferred_element_type=jnp.float32) + b2_ref[...]
    o_ref[...] = (x + y).astype(o_ref.dtype)


def msa_transition(m, mask, params, *, eps=1e-5, tile_rows=None,
                   compute_dtype=jnp.bfloat16):
    """MSATransition forward.

    Args:
      m:    [batch, N_seq, N_res, c_m]
      mask: [batch, N_seq, N_res]  (unused; the reference forward ignores it)
      params: gamma, beta [c_m]; w1 [hidden, c_m], b1 [hidden];
              w2 [c_m, hidden], b2 [c_m]   (PyTorch nn.Linear layout).
      tile_rows: optional row-tile override; auto-sized from a VMEM budget.
      compute_dtype: MXU operand dtype (bf16 default; f32 for exact checks).

    Returns:
      [batch, N_seq, N_res, c_m], same dtype as `m`.
    """
    del mask  # the reference module's forward never applies the mask
    b, s, r, c_m = m.shape
    hidden = params["w1"].shape[0]
    M = b * s * r

    # ---- hoisted parameter casts (no per-grid-step casting in the kernel) --
    gamma = params["gamma"].astype(jnp.float32).reshape(1, c_m)
    beta = params["beta"].astype(jnp.float32).reshape(1, c_m)
    w1_t = params["w1"].T.astype(compute_dtype)               # [c_m, hidden]
    b1 = params["b1"].astype(jnp.float32).reshape(1, hidden)
    w2_t = params["w2"].T.astype(compute_dtype)               # [hidden, c_m]
    b2 = params["b2"].astype(jnp.float32).reshape(1, c_m)

    in_itemsize = m.dtype.itemsize
    w_itemsize = jnp.dtype(compute_dtype).itemsize

    # Rough per-row VMEM footprint inside one tile (double-buffered I/O row
    # tiles + the big f32 / compute-dtype activation temporaries).
    per_row = (2 * c_m * in_itemsize          # double-buffered input tile
               + 2 * c_m * in_itemsize        # double-buffered output tile
               + hidden * 4                   # f32 hidden activations
               + hidden * w_itemsize          # MXU-dtype hidden copy
               + 3 * c_m * 4)                 # f32 x / xn / y temporaries

    # ---- row-tile selection -------------------------------------------------
    if tile_rows is None:
        tile_rows = (16 * 1024 * 1024) // max(per_row, 1)
        tile_rows = max(256, min(2048, (tile_rows // 256) * 256))

    if M > tile_rows:
        # Keep at least two row tiles so both v7x TensorCores get work.
        tile_rows = min(tile_rows, max(256, _round_up(pl.cdiv(M, 2), 256)))

    if M <= tile_rows:
        tm = _round_up(M, 8)          # single tile, sublane-aligned
    else:
        tm = tile_rows
    grid_len = pl.cdiv(M, tm)
    m_pad = grid_len * tm

    m2d = m.reshape(M, c_m)
    if m_pad != M:
        # Zero-pad the partial last tile; zero rows LayerNorm to finite values
        # (var=0 -> rsqrt(eps)), padded output rows are sliced off afterwards.
        m2d = jnp.pad(m2d, ((0, m_pad - M), (0, 0)))

    # ---- VMEM budget + scheduler hints --------------------------------------
    weight_bytes = 2 * (w1_t.size + w2_t.size) * w_itemsize   # double-buffered
    act_bytes = tm * per_row
    vmem_limit = int(min(64 * 1024 * 1024,
                         max(32 * 1024 * 1024, 2 * (weight_bytes + act_bytes))))

    cost = pl.CostEstimate(
        flops=4 * m_pad * c_m * hidden + 10 * m_pad * c_m,
        transcendentals=m_pad,                                 # rsqrt per row
        bytes_accessed=(2 * m_pad * c_m * in_itemsize
                        + (w1_t.size + w2_t.size) * w_itemsize),
    )

    out2d = pl.pallas_call(
        functools.partial(_msa_transition_kernel, eps=eps),
        out_shape=jax.ShapeDtypeStruct((m_pad, c_m), m.dtype),
        grid_spec=pltpu.PrefetchScalarGridSpec(
            num_scalar_prefetch=0,
            grid=(grid_len,),
            in_specs=[
                pl.BlockSpec((tm, c_m), lambda i: (i, 0)),      # m row tile
                pl.BlockSpec((1, c_m), lambda i: (0, 0)),       # gamma (f32)
                pl.BlockSpec((1, c_m), lambda i: (0, 0)),       # beta  (f32)
                pl.BlockSpec((c_m, hidden), lambda i: (0, 0)),  # w1^T  (compute dtype)
                pl.BlockSpec((1, hidden), lambda i: (0, 0)),    # b1    (f32)
                pl.BlockSpec((hidden, c_m), lambda i: (0, 0)),  # w2^T  (compute dtype)
                pl.BlockSpec((1, c_m), lambda i: (0, 0)),       # b2    (f32)
            ],
            out_specs=pl.BlockSpec((tm, c_m), lambda i: (i, 0)),
        ),
        compiler_params=pltpu.CompilerParams(
            dimension_semantics=("parallel",),
            vmem_limit_bytes=vmem_limit,
        ),
        cost_estimate=cost,
    )(m2d, gamma, beta, w1_t, b1, w2_t, b2)

    if m_pad != M:
        out2d = out2d[:M]
    return out2d.reshape(b, s, r, c_m)


def _reference(m, params, eps=1e-5):
    """Pure-JAX f32 reference: out = m + relu(LN(m) @ W1^T + b1) @ W2^T + b2."""
    x = m.astype(jnp.float32)
    mean = jnp.mean(x, axis=-1, keepdims=True)
    var = jnp.mean((x - mean) ** 2, axis=-1, keepdims=True)
    xn = (x - mean) * jax.lax.rsqrt(var + eps)
    xn = xn * params["gamma"] + params["beta"]
    h = jnp.maximum(xn @ params["w1"].T + params["b1"], 0.0)
    y = h @ params["w2"].T + params["b2"]
    return (x + y).astype(m.dtype)


if __name__ == "__main__":
    # Small shapes consistent with the module: batch=2, N_seq=8, N_res=16,
    # c_m=32, n=4 -> hidden=128.  (Production MSA stream uses c_m=256.)
    batch, n_seq, n_res, c_m, n_mult = 2, 8, 16, 32, 4
    hidden = n_mult * c_m

    key = jax.random.PRNGKey(0)
    k_m, k_w1, k_b1, k_w2, k_b2, k_g, k_bt = jax.random.split(key, 7)

    m = jax.random.normal(k_m, (batch, n_seq, n_res, c_m), dtype=jnp.float32)
    mask = jnp.ones((batch, n_seq, n_res), dtype=jnp.float32)

    # Deterministic synthetic parameters (PyTorch nn.Linear [out, in] layout).
    params = {
        "gamma": jax.random.normal(k_g, (c_m,), jnp.float32) * 0.1 + 1.0,
        "beta": jax.random.normal(k_bt, (c_m,), jnp.float32) * 0.1,
        "w1": jax.random.normal(k_w1, (hidden, c_m), jnp.float32) * (2.0 / c_m) ** 0.5,
        "b1": jax.random.normal(k_b1, (hidden,), jnp.float32) * 0.01,
        "w2": jax.random.normal(k_w2, (c_m, hidden), jnp.float32) * (1.0 / hidden) ** 0.5,
        "b2": jax.random.normal(k_b2, (c_m,), jnp.float32) * 0.01,
    }

    ref = _reference(m, params)

    # 1) Exact-path check (f32 MXU operands) — validates kernel logic tightly.
    out_f32 = jax.block_until_ready(
        msa_transition(m, mask, params, compute_dtype=jnp.float32))
    assert out_f32.shape == m.shape and out_f32.dtype == m.dtype
    assert jnp.allclose(out_f32, ref, atol=2e-4, rtol=2e-4), \
        "f32-path mismatch vs reference"

    # 2) Optimized path (bf16 MXU operands, f32 accumulation) — the production
    #    configuration; looser tolerance accounts for bf16 operand rounding.
    out_bf16 = jax.block_until_ready(msa_transition(m, mask, params))
    assert out_bf16.shape == m.shape and out_bf16.dtype == m.dtype
    assert jnp.allclose(out_bf16, ref, atol=5e-2, rtol=5e-2), \
        "bf16-path mismatch vs reference"

    print("KERNEL_OK")
</pallas_src>

<mosaic_0001>
module attributes {stable_mosaic.version = 11 : i64} {
  func.func @_msa_transition_kernel(%arg0: i32, %arg1: memref<256x32xf32, #tpu.memory_space<vmem>>, %arg2: memref<1x32xf32, #tpu.memory_space<vmem>>, %arg3: memref<1x32xf32, #tpu.memory_space<vmem>>, %arg4: memref<32x128xf32, #tpu.memory_space<vmem>>, %arg5: memref<1x128xf32, #tpu.memory_space<vmem>>, %arg6: memref<128x32xf32, #tpu.memory_space<vmem>>, %arg7: memref<1x32xf32, #tpu.memory_space<vmem>>, %arg8: memref<256x32xf32, #tpu.memory_space<vmem>>) attributes {dimension_semantics = [#tpu.dimension_semantics<parallel>], iteration_bounds = array<i64: 1>, scalar_prefetch = 0 : i64, scratch_operands = 0 : i64, tpu.core_type = #tpu.core_type<tc>, window_params = [{transform_indices = @transform_0, window_bounds = array<i64: 256, 32>}, {pipeline_mode = #tpu.pipeline_mode<synchronous>, transform_indices = @transform_1, window_bounds = array<i64: 1, 32>}, {pipeline_mode = #tpu.pipeline_mode<synchronous>, transform_indices = @transform_2, window_bounds = array<i64: 1, 32>}, {pipeline_mode = #tpu.pipeline_mode<synchronous>, transform_indices = @transform_3, window_bounds = array<i64: 32, 128>}, {pipeline_mode = #tpu.pipeline_mode<synchronous>, transform_indices = @transform_4, window_bounds = array<i64: 1, 128>}, {pipeline_mode = #tpu.pipeline_mode<synchronous>, transform_indices = @transform_5, window_bounds = array<i64: 128, 32>}, {pipeline_mode = #tpu.pipeline_mode<synchronous>, transform_indices = @transform_6, window_bounds = array<i64: 1, 32>}, {transform_indices = @transform_7, window_bounds = array<i64: 256, 32>}]} {
    %c0 = arith.constant 0 : index
    %c0_0 = arith.constant 0 : index
    %0 = vector.load %arg1[%c0, %c0_0] : memref<256x32xf32, #tpu.memory_space<vmem>>, vector<256x32xf32>
    %cst = arith.constant dense<0.000000e+00> : vector<256xf32>
    %1 = vector.multi_reduction <add>, %0, %cst [1] : vector<256x32xf32> to vector<256xf32>
    %2 = vector.shape_cast %1 : vector<256xf32> to vector<256x1xf32>
    %cst_1 = arith.constant 3.200000e+01 : f32
    %3 = vector.broadcast %cst_1 : f32 to vector<256x1xf32>
    %4 = arith.divf %2, %3 : vector<256x1xf32>
    %5 = vector.broadcast %4 : vector<256x1xf32> to vector<256x32xf32>
    %6 = arith.subf %0, %5 : vector<256x32xf32>
    %7 = arith.mulf %6, %6 : vector<256x32xf32>
    %cst_2 = arith.constant dense<0.000000e+00> : vector<256xf32>
    %8 = vector.multi_reduction <add>, %7, %cst_2 [1] : vector<256x32xf32> to vector<256xf32>
    %9 = vector.shape_cast %8 : vector<256xf32> to vector<256x1xf32>
    %cst_3 = arith.constant 3.200000e+01 : f32
    %10 = vector.broadcast %cst_3 : f32 to vector<256x1xf32>
    %11 = arith.divf %9, %10 : vector<256x1xf32>
    %cst_4 = arith.constant 9.99999974E-6 : f32
    %12 = vector.broadcast %cst_4 : f32 to vector<256x1xf32>
    %13 = arith.addf %11, %12 : vector<256x1xf32>
    %14 = math.rsqrt %13 : vector<256x1xf32>
    %15 = vector.broadcast %14 : vector<256x1xf32> to vector<256x32xf32>
    %16 = arith.mulf %6, %15 : vector<256x32xf32>
    %c0_5 = arith.constant 0 : index
    %c0_6 = arith.constant 0 : index
    %17 = vector.load %arg2[%c0_5, %c0_6] : memref<1x32xf32, #tpu.memory_space<vmem>>, vector<1x32xf32>
    %18 = vector.broadcast %17 : vector<1x32xf32> to vector<256x32xf32>
    %19 = arith.mulf %16, %18 : vector<256x32xf32>
    %c0_7 = arith.constant 0 : index
    %c0_8 = arith.constant 0 : index
    %20 = vector.load %arg3[%c0_7, %c0_8] : memref<1x32xf32, #tpu.memory_space<vmem>>, vector<1x32xf32>
    %21 = vector.broadcast %20 : vector<1x32xf32> to vector<256x32xf32>
    %22 = arith.addf %19, %21 : vector<256x32xf32>
    %c0_9 = arith.constant 0 : index
    %c0_10 = arith.constant 0 : index
    %23 = vector.load %arg4[%c0_9, %c0_10] : memref<32x128xf32, #tpu.memory_space<vmem>>, vector<32x128xf32>
    %cst_11 = arith.constant dense<0.000000e+00> : vector<256x128xf32>
    %24 = tpu.matmul %22, %23, %cst_11 {dimension_numbers = #tpu.dot_dimension_numbers<[1], [0], [0], [1], [0, 0, 1, 1], [], []>} : vector<256x32xf32>, vector<32x128xf32>, vector<256x128xf32> -> vector<256x128xf32>
    %c0_12 = arith.constant 0 : index
    %c0_13 = arith.constant 0 : index
    %25 = vector.load %arg5[%c0_12, %c0_13] : memref<1x128xf32, #tpu.memory_space<vmem>>, vector<1x128xf32>
    %26 = vector.broadcast %25 : vector<1x128xf32> to vector<256x128xf32>
    %27 = arith.addf %24, %26 : vector<256x128xf32>
    %cst_14 = arith.constant 0.000000e+00 : f32
    %28 = vector.broadcast %cst_14 : f32 to vector<256x128xf32>
    %29 = arith.maximumf %27, %28 : vector<256x128xf32>
    %c0_15 = arith.constant 0 : index
    %c0_16 = arith.constant 0 : index
    %30 = vector.load %arg6[%c0_15, %c0_16] : memref<128x32xf32, #tpu.memory_space<vmem>>, vector<128x32xf32>
    %cst_17 = arith.constant dense<0.000000e+00> : vector<256x32xf32>
    %31 = tpu.matmul %29, %30, %cst_17 {dimension_numbers = #tpu.dot_dimension_numbers<[1], [0], [0], [1], [0, 0, 1, 1], [], []>} : vector<256x128xf32>, vector<128x32xf32>, vector<256x32xf32> -> vector<256x32xf32>
    %c0_18 = arith.constant 0 : index
    %c0_19 = arith.constant 0 : index
    %32 = vector.load %arg7[%c0_18, %c0_19] : memref<1x32xf32, #tpu.memory_space<vmem>>, vector<1x32xf32>
    %33 = vector.broadcast %32 : vector<1x32xf32> to vector<256x32xf32>
    %34 = arith.addf %31, %33 : vector<256x32xf32>
    %35 = arith.addf %0, %34 : vector<256x32xf32>
    %c0_20 = arith.constant 0 : index
    %c0_21 = arith.constant 0 : index
    %36 = vector.load %arg8[%c0_20, %c0_21] : memref<256x32xf32, #tpu.memory_space<vmem>>, vector<256x32xf32>
    tpu.vector_store %arg8[%c0_20, %c0_21], %35 {strides = array<i32>} : memref<256x32xf32, #tpu.memory_space<vmem>>, vector<256x32xf32>,
    return
  }
  func.func @transform_0(%arg0: i32) -> (i32, i32) {
    %c0_i32 = arith.constant 0 : i32
    %c0_i32_0 = arith.constant 0 : i32
    return %arg0, %c0_i32 : i32, i32
  }
  func.func @transform_1(%arg0: i32) -> (i32, i32) {
    %c0_i32 = arith.constant 0 : i32
    %c0_i32_0 = arith.constant 0 : i32
    %c0_i32_1 = arith.constant 0 : i32
    return %c0_i32, %c0_i32_0 : i32, i32
  }
  func.func @transform_2(%arg0: i32) -> (i32, i32) {
    %c0_i32 = arith.constant 0 : i32
    %c0_i32_0 = arith.constant 0 : i32
    %c0_i32_1 = arith.constant 0 : i32
    return %c0_i32, %c0_i32_0 : i32, i32
  }
  func.func @transform_3(%arg0: i32) -> (i32, i32) {
    %c0_i32 = arith.constant 0 : i32
    %c0_i32_0 = arith.constant 0 : i32
    %c0_i32_1 = arith.constant 0 : i32
    return %c0_i32, %c0_i32_0 : i32, i32
  }
  func.func @transform_4(%arg0: i32) -> (i32, i32) {
    %c0_i32 = arith.constant 0 : i32
    %c0_i32_0 = arith.constant 0 : i32
    %c0_i32_1 = arith.constant 0 : i32
    return %c0_i32, %c0_i32_0 : i32, i32
  }
  func.func @transform_5(%arg0: i32) -> (i32, i32) {
    %c0_i32 = arith.constant 0 : i32
    %c0_i32_0 = arith.constant 0 : i32
    %c0_i32_1 = arith.constant 0 : i32
    return %c0_i32, %c0_i32_0 : i32, i32
  }
  func.func @transform_6(%arg0: i32) -> (i32, i32) {
    %c0_i32 = arith.constant 0 : i32
    %c0_i32_0 = arith.constant 0 : i32
    %c0_i32_1 = arith.constant 0 : i32
    return %c0_i32, %c0_i32_0 : i32, i32
  }
  func.func @transform_7(%arg0: i32) -> (i32, i32) {
    %c0_i32 = arith.constant 0 : i32
    %c0_i32_0 = arith.constant 0 : i32
    return %arg0, %c0_i32 : i32, i32
  }
}

</mosaic_0001>

<llo_original>
// kernel: tpu_custom_call.1
$region0: #{tpu_custom_call.1}
  #allocation0 [shape = 'u32[]', space=smem, size = 0x4, offset = 0x4, fixed_abs, tag = 'smem constant byte address 0x4 - core index']
  #allocation1 [shape = 'u32[72,128]{1,0:T(1,128)}', space=vmem, size = 0x9000, scoped, tag = 'internal scratch']
  %s0 = inlined_call_operand.vmem [shape: f32[256,32], index: 0, kind: input, shape index: {}]
  %s1 = inlined_call_operand.vmem [shape: f32[1,32], index: 1, kind: input, shape index: {}]
  %s2 = inlined_call_operand.vmem [shape: f32[1,32], index: 2, kind: input, shape index: {}]
  %s3 = inlined_call_operand.vmem [shape: f32[32,128], index: 3, kind: input, shape index: {}]
  %s4 = inlined_call_operand.vmem [shape: f32[1,128], index: 4, kind: input, shape index: {}]
  %s5 = inlined_call_operand.vmem [shape: f32[128,32], index: 5, kind: input, shape index: {}]
  %s6 = inlined_call_operand.vmem [shape: f32[1,32], index: 6, kind: input, shape index: {}]
  %s7 = inlined_call_operand.vmem [shape: f32[256,32], index: 7, kind: output, shape index: {}]
  %s8 = sld [smem:[#allocation0]]
  $region38: #{tpu_custom_call.1} parent=0
    _
  %s10 = ssub.s32 1, %s8
  %s11 = scalar_select 0, %s10, %s8
  // Predicated region
  $region2: #{tpu_custom_call.1} parent=0 // pred_check
    _
  $region3: #{tpu_custom_call.1} parent=0 // pred_check_branch
    %13 = sbr.rel (0) target = $region5
  $region4: #{tpu_custom_call.1} parent=0 // pred_region
    _
  $region5: #{tpu_custom_call.1} parent=0 // pred_fallthru
    _
  // Predicated region
  $region6: #{tpu_custom_call.1} parent=0 // pred_check
    _
  $region7: #{tpu_custom_call.1} parent=0 // pred_check_branch
    %15 = sbr.rel (0) target = $region9
  $region8: #{tpu_custom_call.1} parent=0 // pred_region
    _
  $region9: #{tpu_custom_call.1} parent=0 // pred_fallthru
    _
  // Predicated region
  $region10: #{tpu_custom_call.1} parent=0 // pred_check
    _
  $region11: #{tpu_custom_call.1} parent=0 // pred_check_branch
    %17 = sbr.rel (0) target = $region13
  $region12: #{tpu_custom_call.1} parent=0 // pred_region
    _
  $region13: #{tpu_custom_call.1} parent=0 // pred_fallthru
    _
  // Predicated region
  $region14: #{tpu_custom_call.1} parent=0 // pred_check
    _
  $region15: #{tpu_custom_call.1} parent=0 // pred_check_branch
    %19 = sbr.rel (0) target = $region17
  $region16: #{tpu_custom_call.1} parent=0 // pred_region
    _
  $region17: #{tpu_custom_call.1} parent=0 // pred_fallthru
    _
  // Predicated region
  $region18: #{tpu_custom_call.1} parent=0 // pred_check
    _
  $region19: #{tpu_custom_call.1} parent=0 // pred_check_branch
    %21 = sbr.rel (0) target = $region21
  $region20: #{tpu_custom_call.1} parent=0 // pred_region
    _
  $region21: #{tpu_custom_call.1} parent=0 // pred_fallthru
    _
  // Predicated region
  $region22: #{tpu_custom_call.1} parent=0 // pred_check
    _
  $region23: #{tpu_custom_call.1} parent=0 // pred_check_branch
    %23 = sbr.rel (0) target = $region25
  $region24: #{tpu_custom_call.1} parent=0 // pred_region
    _
  $region25: #{tpu_custom_call.1} parent=0 // pred_fallthru
    _
  // Predicated region
  $region26: #{tpu_custom_call.1} parent=0 // pred_check
    _
  $region27: #{tpu_custom_call.1} parent=0 // pred_check_branch
    %25 = sbr.rel (0) target = $region29
  $region28: #{tpu_custom_call.1} parent=0 // pred_region
    _
  $region29: #{tpu_custom_call.1} parent=0 // pred_fallthru
    _
  %v26 = vld [vmem:[%s0] sm:$0xff]
  %v27 = vld [vmem:[%s0 + $0x8] sm:$0xff]
  %v28 = vld [vmem:[%s0 + $0x10] sm:$0xff]
  %v29 = vld [vmem:[%s0 + $0x18] sm:$0xff]
  %v30 = vld [vmem:[%s0 + $0x20] sm:$0xff]
  %v31 = vld [vmem:[%s0 + $0x28] sm:$0xff]
  %v32 = vld [vmem:[%s0 + $0x30] sm:$0xff]
  %v33 = vld [vmem:[%s0 + $0x38] sm:$0xff]
  %v34 = vld [vmem:[%s0 + $0x40] sm:$0xff]
  %v35 = vld [vmem:[%s0 + $0x48] sm:$0xff]
  %v36 = vld [vmem:[%s0 + $0x50] sm:$0xff]
  %v37 = vld [vmem:[%s0 + $0x58] sm:$0xff]
  %v38 = vld [vmem:[%s0 + $0x60] sm:$0xff]
  %v39 = vld [vmem:[%s0 + $0x68] sm:$0xff]
  %v40 = vld [vmem:[%s0 + $0x70] sm:$0xff]
  %v41 = vld [vmem:[%s0 + $0x78] sm:$0xff]
  %v42 = vld [vmem:[%s0 + $0x80] sm:$0xff]
  %v43 = vld [vmem:[%s0 + $0x88] sm:$0xff]
  %v44 = vld [vmem:[%s0 + $0x90] sm:$0xff]
  %v45 = vld [vmem:[%s0 + $0x98] sm:$0xff]
  %v46 = vld [vmem:[%s0 + $0xa0] sm:$0xff]
  %v47 = vld [vmem:[%s0 + $0xa8] sm:$0xff]
  %v48 = vld [vmem:[%s0 + $0xb0] sm:$0xff]
  %v49 = vld [vmem:[%s0 + $0xb8] sm:$0xff]
  %v50 = vld [vmem:[%s0 + $0xc0] sm:$0xff]
  %v51 = vld [vmem:[%s0 + $0xc8] sm:$0xff]
  %v52 = vld [vmem:[%s0 + $0xd0] sm:$0xff]
  %v53 = vld [vmem:[%s0 + $0xd8] sm:$0xff]
  %v54 = vld [vmem:[%s0 + $0xe0] sm:$0xff]
  %v55 = vld [vmem:[%s0 + $0xe8] sm:$0xff]
  %v56 = vld [vmem:[%s0 + $0xf0] sm:$0xff]
  %v57 = vld [vmem:[%s0 + $0xf8] sm:$0xff]
  %vm58 = vcmask 261120
  %v59 = vsel %vm58, %v26, 0.0
  %60 = vadd.xlane.f32.xlu0 %v59
  %v61 = vpop.xlane.xlu0 %60
  %v62 = vsel %vm58, %v27, 0.0
  %63 = vadd.xlane.f32.xlu0 %v62
  %v64 = vpop.xlane.xlu0 %63
  %v65 = vsel %vm58, %v28, 0.0
  %66 = vadd.xlane.f32.xlu0 %v65
  %v67 = vpop.xlane.xlu0 %66
  %v68 = vsel %vm58, %v29, 0.0
  %69 = vadd.xlane.f32.xlu0 %v68
  %v70 = vpop.xlane.xlu0 %69
  %v71 = vsel %vm58, %v30, 0.0
  %72 = vadd.xlane.f32.xlu0 %v71
  %v73 = vpop.xlane.xlu0 %72
  %v74 = vsel %vm58, %v31, 0.0
  %75 = vadd.xlane.f32.xlu0 %v74
  %v76 = vpop.xlane.xlu0 %75
  %v77 = vsel %vm58, %v32, 0.0
  %78 = vadd.xlane.f32.xlu0 %v77
  %v79 = vpop.xlane.xlu0 %78
  %v80 = vsel %vm58, %v33, 0.0
  %81 = vadd.xlane.f32.xlu0 %v80
  %v82 = vpop.xlane.xlu0 %81
  %v83 = vsel %vm58, %v34, 0.0
  %84 = vadd.xlane.f32.xlu0 %v83
  %v85 = vpop.xlane.xlu0 %84
  %v86 = vsel %vm58, %v35, 0.0
  %87 = vadd.xlane.f32.xlu0 %v86
  %v88 = vpop.xlane.xlu0 %87
  %v89 = vsel %vm58, %v36, 0.0
  %90 = vadd.xlane.f32.xlu0 %v89
  %v91 = vpop.xlane.xlu0 %90
  %v92 = vsel %vm58, %v37, 0.0
  %93 = vadd.xlane.f32.xlu0 %v92
  %v94 = vpop.xlane.xlu0 %93
  %v95 = vsel %vm58, %v38, 0.0
  %96 = vadd.xlane.f32.xlu0 %v95
  %v97 = vpop.xlane.xlu0 %96
  %v98 = vsel %vm58, %v39, 0.0
  %99 = vadd.xlane.f32.xlu0 %v98
  %v100 = vpop.xlane.xlu0 %99
  %v101 = vsel %vm58, %v40, 0.0
  %102 = vadd.xlane.f32.xlu0 %v101
  %v103 = vpop.xlane.xlu0 %102
  %v104 = vsel %vm58, %v41, 0.0
  %105 = vadd.xlane.f32.xlu0 %v104
  %v106 = vpop.xlane.xlu0 %105
  %v107 = vsel %vm58, %v42, 0.0
  %108 = vadd.xlane.f32.xlu0 %v107
  %v109 = vpop.xlane.xlu0 %108
  %v110 = vsel %vm58, %v43, 0.0
  %111 = vadd.xlane.f32.xlu0 %v110
  %v112 = vpop.xlane.xlu0 %111
  %v113 = vsel %vm58, %v44, 0.0
  %114 = vadd.xlane.f32.xlu0 %v113
  %v115 = vpop.xlane.xlu0 %114
  %v116 = vsel %vm58, %v45, 0.0
  %117 = vadd.xlane.f32.xlu0 %v116
  %v118 = vpop.xlane.xlu0 %117
  %v119 = vsel %vm58, %v46, 0.0
  %120 = vadd.xlane.f32.xlu0 %v119
  %v121 = vpop.xlane.xlu0 %120
  %v122 = vsel %vm58, %v47, 0.0
  %123 = vadd.xlane.f32.xlu0 %v122
  %v124 = vpop.xlane.xlu0 %123
  %v125 = vsel %vm58, %v48, 0.0
  %126 = vadd.xlane.f32.xlu0 %v125
  %v127 = vpop.xlane.xlu0 %126
  %v128 = vsel %vm58, %v49, 0.0
  %129 = vadd.xlane.f32.xlu0 %v128
  %v130 = vpop.xlane.xlu0 %129
  %v131 = vsel %vm58, %v50, 0.0
  %132 = vadd.xlane.f32.xlu0 %v131
  %v133 = vpop.xlane.xlu0 %132
  %v134 = vsel %vm58, %v51, 0.0
  %135 = vadd.xlane.f32.xlu0 %v134
  %v136 = vpop.xlane.xlu0 %135
  %v137 = vsel %vm58, %v52, 0.0
  %138 = vadd.xlane.f32.xlu0 %v137
  %v139 = vpop.xlane.xlu0 %138
  %v140 = vsel %vm58, %v53, 0.0
  %141 = vadd.xlane.f32.xlu0 %v140
  %v142 = vpop.xlane.xlu0 %141
  %v143 = vsel %vm58, %v54, 0.0
  %144 = vadd.xlane.f32.xlu0 %v143
  %v145 = vpop.xlane.xlu0 %144
  %v146 = vsel %vm58, %v55, 0.0
  %147 = vadd.xlane.f32.xlu0 %v146
  %v148 = vpop.xlane.xlu0 %147
  %v149 = vsel %vm58, %v56, 0.0
  %150 = vadd.xlane.f32.xlu0 %v149
  %v151 = vpop.xlane.xlu0 %150
  %v152 = vsel %vm58, %v57, 0.0
  %153 = vadd.xlane.f32.xlu0 %v152
  %v154 = vpop.xlane.xlu0 %153
  %v155 = vrcp.pop 32.0
  %v156 = vmul.f32 32.0, %v155
  %v157 = vsub.f32 1.0, %v156
  %v158 = vmul.f32 %v155, %v157
  %v159 = vadd.f32 %v155, %v158
  %vm160 = vweird.f32 %v155
  %v161 = vsel %vm160, %v155, %v159
  %v162 = vmul.f32 %v61, %v161
  %v163 = vmul.f32 %v64, %v161
  %v164 = vmul.f32 %v67, %v161
  %v165 = vmul.f32 %v70, %v161
  %v166 = vmul.f32 %v73, %v161
  %v167 = vmul.f32 %v76, %v161
  %v168 = vmul.f32 %v79, %v161
  %v169 = vmul.f32 %v82, %v161
  %v170 = vmul.f32 %v85, %v161
  %v171 = vmul.f32 %v88, %v161
  %v172 = vmul.f32 %v91, %v161
  %v173 = vmul.f32 %v94, %v161
  %v174 = vmul.f32 %v97, %v161
  %v175 = vmul.f32 %v100, %v161
  %v176 = vmul.f32 %v103, %v161
  %v177 = vmul.f32 %v106, %v161
  %v178 = vmul.f32 %v109, %v161
  %v179 = vmul.f32 %v112, %v161
  %v180 = vmul.f32 %v115, %v161
  %v181 = vmul.f32 %v118, %v161
  %v182 = vmul.f32 %v121, %v161
  %v183 = vmul.f32 %v124, %v161
  %v184 = vmul.f32 %v127, %v161
  %v185 = vmul.f32 %v130, %v161
  %v186 = vmul.f32 %v133, %v161
  %v187 = vmul.f32 %v136, %v161
  %v188 = vmul.f32 %v139, %v161
  %v189 = vmul.f32 %v142, %v161
  %v190 = vmul.f32 %v145, %v161
  %v191 = vmul.f32 %v148, %v161
  %v192 = vmul.f32 %v151, %v161
  %v193 = vmul.f32 %v154, %v161
  %v194 = vsub.f32 %v26, %v162
  %v195 = vsub.f32 %v27, %v163
  %v196 = vsub.f32 %v28, %v164
  %v197 = vsub.f32 %v29, %v165
  %v198 = vsub.f32 %v30, %v166
  %v199 = vsub.f32 %v31, %v167
  %v200 = vsub.f32 %v32, %v168
  %v201 = vsub.f32 %v33, %v169
  %v202 = vsub.f32 %v34, %v170
  %v203 = vsub.f32 %v35, %v171
  %v204 = vsub.f32 %v36, %v172
  %v205 = vsub.f32 %v37, %v173
  %v206 = vsub.f32 %v38, %v174
  %v207 = vsub.f32 %v39, %v175
  %v208 = vsub.f32 %v40, %v176
  %v209 = vsub.f32 %v41, %v177
  %v210 = vsub.f32 %v42, %v178
  %v211 = vsub.f32 %v43, %v179
  %v212 = vsub.f32 %v44, %v180
  %v213 = vsub.f32 %v45, %v181
  %v214 = vsub.f32 %v46, %v182
  %v215 = vsub.f32 %v47, %v183
  %v216 = vsub.f32 %v48, %v184
  %v217 = vsub.f32 %v49, %v185
  %v218 = vsub.f32 %v50, %v186
  %v219 = vsub.f32 %v51, %v187
  %v220 = vsub.f32 %v52, %v188
  %v221 = vsub.f32 %v53, %v189
  %v222 = vsub.f32 %v54, %v190
  %v223 = vsub.f32 %v55, %v191
  %v224 = vsub.f32 %v56, %v192
  %v225 = vsub.f32 %v57, %v193
  %v226 = vmul.f32 %v194, %v194
  %v227 = vmul.f32 %v195, %v195
  %v228 = vmul.f32 %v196, %v196
  %v229 = vmul.f32 %v197, %v197
  %v230 = vmul.f32 %v198, %v198
  %v231 = vmul.f32 %v199, %v199
  %v232 = vmul.f32 %v200, %v200
  %v233 = vmul.f32 %v201, %v201
  %v234 = vmul.f32 %v202, %v202
  %v235 = vmul.f32 %v203, %v203
  %v236 = vmul.f32 %v204, %v204
  %v237 = vmul.f32 %v205, %v205
  %v238 = vmul.f32 %v206, %v206
  %v239 = vmul.f32 %v207, %v207
  %v240 = vmul.f32 %v208, %v208
  %v241 = vmul.f32 %v209, %v209
  %v242 = vmul.f32 %v210, %v210
  %v243 = vmul.f32 %v211, %v211
  %v244 = vmul.f32 %v212, %v212
  %v245 = vmul.f32 %v213, %v213
  %v246 = vmul.f32 %v214, %v214
  %v247 = vmul.f32 %v215, %v215
  %v248 = vmul.f32 %v216, %v216
  %v249 = vmul.f32 %v217, %v217
  %v250 = vmul.f32 %v218, %v218
  %v251 = vmul.f32 %v219, %v219
  %v252 = vmul.f32 %v220, %v220
  %v253 = vmul.f32 %v221, %v221
  %v254 = vmul.f32 %v222, %v222
  %v255 = vmul.f32 %v223, %v223
  %v256 = vmul.f32 %v224, %v224
  %v257 = vmul.f32 %v225, %v225
  %v258 = vsel %vm58, %v226, 0.0
  %259 = vadd.xlane.f32.xlu0 %v258
  %v260 = vpop.xlane.xlu0 %259
  %v261 = vsel %vm58, %v227, 0.0
  %262 = vadd.xlane.f32.xlu0 %v261
  %v263 = vpop.xlane.xlu0 %262
  %v264 = vsel %vm58, %v228, 0.0
  %265 = vadd.xlane.f32.xlu0 %v264
  %v266 = vpop.xlane.xlu0 %265
  %v267 = vsel %vm58, %v229, 0.0
  %268 = vadd.xlane.f32.xlu0 %v267
  %v269 = vpop.xlane.xlu0 %268
  %v270 = vsel %vm58, %v230, 0.0
  %271 = vadd.xlane.f32.xlu0 %v270
  %v272 = vpop.xlane.xlu0 %271
  %v273 = vsel %vm58, %v231, 0.0
  %274 = vadd.xlane.f32.xlu0 %v273
  %v275 = vpop.xlane.xlu0 %274
  %v276 = vsel %vm58, %v232, 0.0
  %277 = vadd.xlane.f32.xlu0 %v276
  %v278 = vpop.xlane.xlu0 %277
  %v279 = vsel %vm58, %v233, 0.0
  %280 = vadd.xlane.f32.xlu0 %v279
  %v281 = vpop.xlane.xlu0 %280
  %v282 = vsel %vm58, %v234, 0.0
  %283 = vadd.xlane.f32.xlu0 %v282
  %v284 = vpop.xlane.xlu0 %283
  %v285 = vsel %vm58, %v235, 0.0
  %286 = vadd.xlane.f32.xlu0 %v285
  %v287 = vpop.xlane.xlu0 %286
  %v288 = vsel %vm58, %v236, 0.0
  %289 = vadd.xlane.f32.xlu0 %v288
  %v290 = vpop.xlane.xlu0 %289
  %v291 = vsel %vm58, %v237, 0.0
  %292 = vadd.xlane.f32.xlu0 %v291
  %v293 = vpop.xlane.xlu0 %292
  %v294 = vsel %vm58, %v238, 0.0
  %295 = vadd.xlane.f32.xlu0 %v294
  %v296 = vpop.xlane.xlu0 %295
  %v297 = vsel %vm58, %v239, 0.0
  %298 = vadd.xlane.f32.xlu0 %v297
  %v299 = vpop.xlane.xlu0 %298
  %v300 = vsel %vm58, %v240, 0.0
  %301 = vadd.xlane.f32.xlu0 %v300
  %v302 = vpop.xlane.xlu0 %301
  %v303 = vsel %vm58, %v241, 0.0
  %304 = vadd.xlane.f32.xlu0 %v303
  %v305 = vpop.xlane.xlu0 %304
  %v306 = vsel %vm58, %v242, 0.0
  %307 = vadd.xlane.f32.xlu0 %v306
  %v308 = vpop.xlane.xlu0 %307
  %v309 = vsel %vm58, %v243, 0.0
  %310 = vadd.xlane.f32.xlu0 %v309
  %v311 = vpop.xlane.xlu0 %310
  %v312 = vsel %vm58, %v244, 0.0
  %313 = vadd.xlane.f32.xlu0 %v312
  %v314 = vpop.xlane.xlu0 %313
  %v315 = vsel %vm58, %v245, 0.0
  %316 = vadd.xlane.f32.xlu0 %v315
  %v317 = vpop.xlane.xlu0 %316
  %v318 = vsel %vm58, %v246, 0.0
  %319 = vadd.xlane.f32.xlu0 %v318
  %v320 = vpop.xlane.xlu0 %319
  %v321 = vsel %vm58, %v247, 0.0
  %322 = vadd.xlane.f32.xlu0 %v321
  %v323 = vpop.xlane.xlu0 %322
  %v324 = vsel %vm58, %v248, 0.0
  %325 = vadd.xlane.f32.xlu0 %v324
  %v326 = vpop.xlane.xlu0 %325
  %v327 = vsel %vm58, %v249, 0.0
  %328 = vadd.xlane.f32.xlu0 %v327
  %v329 = vpop.xlane.xlu0 %328
  %v330 = vsel %vm58, %v250, 0.0
  %331 = vadd.xlane.f32.xlu0 %v330
  %v332 = vpop.xlane.xlu0 %331
  %v333 = vsel %vm58, %v251, 0.0
  %334 = vadd.xlane.f32.xlu0 %v333
  %v335 = vpop.xlane.xlu0 %334
  %v336 = vsel %vm58, %v252, 0.0
  %337 = vadd.xlane.f32.xlu0 %v336
  %v338 = vpop.xlane.xlu0 %337
  %v339 = vsel %vm58, %v253, 0.0
  %340 = vadd.xlane.f32.xlu0 %v339
  %v341 = vpop.xlane.xlu0 %340
  %v342 = vsel %vm58, %v254, 0.0
  %343 = vadd.xlane.f32.xlu0 %v342
  %v344 = vpop.xlane.xlu0 %343
  %v345 = vsel %vm58, %v255, 0.0
  %346 = vadd.xlane.f32.xlu0 %v345
  %v347 = vpop.xlane.xlu0 %346
  %v348 = vsel %vm58, %v256, 0.0
  %349 = vadd.xlane.f32.xlu0 %v348
  %v350 = vpop.xlane.xlu0 %349
  %v351 = vsel %vm58, %v257, 0.0
  %352 = vadd.xlane.f32.xlu0 %v351
  %v353 = vpop.xlane.xlu0 %352
  %v354 = vmul.f32 %v260, %v161
  %v355 = vmul.f32 %v263, %v161
  %v356 = vmul.f32 %v266, %v161
  %v357 = vmul.f32 %v269, %v161
  %v358 = vmul.f32 %v272, %v161
  %v359 = vmul.f32 %v275, %v161
  %v360 = vmul.f32 %v278, %v161
  %v361 = vmul.f32 %v281, %v161
  %v362 = vmul.f32 %v284, %v161
  %v363 = vmul.f32 %v287, %v161
  %v364 = vmul.f32 %v290, %v161
  %v365 = vmul.f32 %v293, %v161
  %v366 = vmul.f32 %v296, %v161
  %v367 = vmul.f32 %v299, %v161
  %v368 = vmul.f32 %v302, %v161
  %v369 = vmul.f32 %v305, %v161
  %v370 = vmul.f32 %v308, %v161
  %v371 = vmul.f32 %v311, %v161
  %v372 = vmul.f32 %v314, %v161
  %v373 = vmul.f32 %v317, %v161
  %v374 = vmul.f32 %v320, %v161
  %v375 = vmul.f32 %v323, %v161
  %v376 = vmul.f32 %v326, %v161
  %v377 = vmul.f32 %v329, %v161
  %v378 = vmul.f32 %v332, %v161
  %v379 = vmul.f32 %v335, %v161
  %v380 = vmul.f32 %v338, %v161
  %v381 = vmul.f32 %v341, %v161
  %v382 = vmul.f32 %v344, %v161
  %v383 = vmul.f32 %v347, %v161
  %v384 = vmul.f32 %v350, %v161
  %v385 = vmul.f32 %v353, %v161
  %v386 = vadd.f32 %v354, 1e-05
  %v387 = vadd.f32 %v355, 1e-05
  %v388 = vadd.f32 %v356, 1e-05
  %v389 = vadd.f32 %v357, 1e-05
  %v390 = vadd.f32 %v358, 1e-05
  %v391 = vadd.f32 %v359, 1e-05
  %v392 = vadd.f32 %v360, 1e-05
  %v393 = vadd.f32 %v361, 1e-05
  %v394 = vadd.f32 %v362, 1e-05
  %v395 = vadd.f32 %v363, 1e-05
  %v396 = vadd.f32 %v364, 1e-05
  %v397 = vadd.f32 %v365, 1e-05
  %v398 = vadd.f32 %v366, 1e-05
  %v399 = vadd.f32 %v367, 1e-05
  %v400 = vadd.f32 %v368, 1e-05
  %v401 = vadd.f32 %v369, 1e-05
  %v402 = vadd.f32 %v370, 1e-05
  %v403 = vadd.f32 %v371, 1e-05
  %v404 = vadd.f32 %v372, 1e-05
  %v405 = vadd.f32 %v373, 1e-05
  %v406 = vadd.f32 %v374, 1e-05
  %v407 = vadd.f32 %v375, 1e-05
  %v408 = vadd.f32 %v376, 1e-05
  %v409 = vadd.f32 %v377, 1e-05
  %v410 = vadd.f32 %v378, 1e-05
  %v411 = vadd.f32 %v379, 1e-05
  %v412 = vadd.f32 %v380, 1e-05
  %v413 = vadd.f32 %v381, 1e-05
  %v414 = vadd.f32 %v382, 1e-05
  %v415 = vadd.f32 %v383, 1e-05
  %v416 = vadd.f32 %v384, 1e-05
  %v417 = vadd.f32 %v385, 1e-05
  %v418 = vrsqrt.pop %v386
  %v419 = vmul.f32 %v418, %v386
  %v420 = vmul.f32 %v419, %v418
  %v421 = vmul.f32 0.5, %v420
  %v422 = vsub.f32 1.5, %v421
  %v423 = vmul.f32 %v418, %v422
  %vm424 = vweird.f32 %v386
  %vm425 = vweird.f32 %v418
  %vm426 = vmor %vm424, %vm425
  %v427 = vsel %vm426, %v418, %v423
  %v428 = vrsqrt.pop %v387
  %v429 = vmul.f32 %v428, %v387
  %v430 = vmul.f32 %v429, %v428
  %v431 = vmul.f32 0.5, %v430
  %v432 = vsub.f32 1.5, %v431
  %v433 = vmul.f32 %v428, %v432
  %vm434 = vweird.f32 %v387
  %vm435 = vweird.f32 %v428
  %vm436 = vmor %vm434, %vm435
  %v437 = vsel %vm436, %v428, %v433
  %v438 = vrsqrt.pop %v388
  %v439 = vmul.f32 %v438, %v388
  %v440 = vmul.f32 %v439, %v438
  %v441 = vmul.f32 0.5, %v440
  %v442 = vsub.f32 1.5, %v441
  %v443 = vmul.f32 %v438, %v442
  %vm444 = vweird.f32 %v388
  %vm445 = vweird.f32 %v438
  %vm446 = vmor %vm444, %vm445
  %v447 = vsel %vm446, %v438, %v443
  %v448 = vrsqrt.pop %v389
  %v449 = vmul.f32 %v448, %v389
  %v450 = vmul.f32 %v449, %v448
  %v451 = vmul.f32 0.5, %v450
  %v452 = vsub.f32 1.5, %v451
  %v453 = vmul.f32 %v448, %v452
  %vm454 = vweird.f32 %v389
  %vm455 = vweird.f32 %v448
  %vm456 = vmor %vm454, %vm455
  %v457 = vsel %vm456, %v448, %v453
  %v458 = vrsqrt.pop %v390
  %v459 = vmul.f32 %v458, %v390
  %v460 = vmul.f32 %v459, %v458
  %v461 = vmul.f32 0.5, %v460
  %v462 = vsub.f32 1.5, %v461
  %v463 = vmul.f32 %v458, %v462
  %vm464 = vweird.f32 %v390
  %vm465 = vweird.f32 %v458
  %vm466 = vmor %vm464, %vm465
  %v467 = vsel %vm466, %v458, %v463
  %v468 = vrsqrt.pop %v391
  %v469 = vmul.f32 %v468, %v391
  %v470 = vmul.f32 %v469, %v468
  %v471 = vmul.f32 0.5, %v470
  %v472 = vsub.f32 1.5, %v471
  %v473 = vmul.f32 %v468, %v472
  %vm474 = vweird.f32 %v391
  %vm475 = vweird.f32 %v468
  %vm476 = vmor %vm474, %vm475
  %v477 = vsel %vm476, %v468, %v473
  %v478 = vrsqrt.pop %v392
  %v479 = vmul.f32 %v478, %v392
  %v480 = vmul.f32 %v479, %v478
  %v481 = vmul.f32 0.5, %v480
  %v482 = vsub.f32 1.5, %v481
  %v483 = vmul.f32 %v478, %v482
  %vm484 = vweird.f32 %v392
  %vm485 = vweird.f32 %v478
  %vm486 = vmor %vm484, %vm485
  %v487 = vsel %vm486, %v478, %v483
  %v488 = vrsqrt.pop %v393
  %v489 = vmul.f32 %v488, %v393
  %v490 = vmul.f32 %v489, %v488
  %v491 = vmul.f32 0.5, %v490
  %v492 = vsub.f32 1.5, %v491
  %v493 = vmul.f32 %v488, %v492
  %vm494 = vweird.f32 %v393
  %vm495 = vweird.f32 %v488
  %vm496 = vmor %vm494, %vm495
  %v497 = vsel %vm496, %v488, %v493
  %v498 = vrsqrt.pop %v394
  %v499 = vmul.f32 %v498, %v394
  %v500 = vmul.f32 %v499, %v498
  %v501 = vmul.f32 0.5, %v500
  %v502 = vsub.f32 1.5, %v501
  %v503 = vmul.f32 %v498, %v502
  %vm504 = vweird.f32 %v394
  %vm505 = vweird.f32 %v498
  %vm506 = vmor %vm504, %vm505
  %v507 = vsel %vm506, %v498, %v503
  %v508 = vrsqrt.pop %v395
  %v509 = vmul.f32 %v508, %v395
  %v510 = vmul.f32 %v509, %v508
  %v511 = vmul.f32 0.5, %v510
  %v512 = vsub.f32 1.5, %v511
  %v513 = vmul.f32 %v508, %v512
  %vm514 = vweird.f32 %v395
  %vm515 = vweird.f32 %v508
  %vm516 = vmor %vm514, %vm515
  %v517 = vsel %vm516, %v508, %v513
  %v518 = vrsqrt.pop %v396
  %v519 = vmul.f32 %v518, %v396
  %v520 = vmul.f32 %v519, %v518
  %v521 = vmul.f32 0.5, %v520
  %v522 = vsub.f32 1.5, %v521
  %v523 = vmul.f32 %v518, %v522
  %vm524 = vweird.f32 %v396
  %vm525 = vweird.f32 %v518
  %vm526 = vmor %vm524, %vm525
  %v527 = vsel %vm526, %v518, %v523
  %v528 = vrsqrt.pop %v397
  %v529 = vmul.f32 %v528, %v397
  %v530 = vmul.f32 %v529, %v528
  %v531 = vmul.f32 0.5, %v530
  %v532 = vsub.f32 1.5, %v531
  %v533 = vmul.f32 %v528, %v532
  %vm534 = vweird.f32 %v397
  %vm535 = vweird.f32 %v528
  %vm536 = vmor %vm534, %vm535
  %v537 = vsel %vm536, %v528, %v533
  %v538 = vrsqrt.pop %v398
  %v539 = vmul.f32 %v538, %v398
  %v540 = vmul.f32 %v539, %v538
  %v541 = vmul.f32 0.5, %v540
  %v542 = vsub.f32 1.5, %v541
  %v543 = vmul.f32 %v538, %v542
  %vm544 = vweird.f32 %v398
  %vm545 = vweird.f32 %v538
  %vm546 = vmor %vm544, %vm545
  %v547 = vsel %vm546, %v538, %v543
  %v548 = vrsqrt.pop %v399
  %v549 = vmul.f32 %v548, %v399
  %v550 = vmul.f32 %v549, %v548
  %v551 = vmul.f32 0.5, %v550
  %v552 = vsub.f32 1.5, %v551
  %v553 = vmul.f32 %v548, %v552
  %vm554 = vweird.f32 %v399
  %vm555 = vweird.f32 %v548
  %vm556 = vmor %vm554, %vm555
  %v557 = vsel %vm556, %v548, %v553
  %v558 = vrsqrt.pop %v400
  %v559 = vmul.f32 %v558, %v400
  %v560 = vmul.f32 %v559, %v558
  %v561 = vmul.f32 0.5, %v560
  %v562 = vsub.f32 1.5, %v561
  %v563 = vmul.f32 %v558, %v562
  %vm564 = vweird.f32 %v400
  %vm565 = vweird.f32 %v558
  %vm566 = vmor %vm564, %vm565
  %v567 = vsel %vm566, %v558, %v563
  %v568 = vrsqrt.pop %v401
  %v569 = vmul.f32 %v568, %v401
  %v570 = vmul.f32 %v569, %v568
  %v571 = vmul.f32 0.5, %v570
  %v572 = vsub.f32 1.5, %v571
  %v573 = vmul.f32 %v568, %v572
  %vm574 = vweird.f32 %v401
  %vm575 = vweird.f32 %v568
  %vm576 = vmor %vm574, %vm575
  %v577 = vsel %vm576, %v568, %v573
  %v578 = vrsqrt.pop %v402
  %v579 = vmul.f32 %v578, %v402
  %v580 = vmul.f32 %v579, %v578
  %v581 = vmul.f32 0.5, %v580
  %v582 = vsub.f32 1.5, %v581
  %v583 = vmul.f32 %v578, %v582
  %vm584 = vweird.f32 %v402
  %vm585 = vweird.f32 %v578
  %vm586 = vmor %vm584, %vm585
  %v587 = vsel %vm586, %v578, %v583
  %v588 = vrsqrt.pop %v403
  %v589 = vmul.f32 %v588, %v403
  %v590 = vmul.f32 %v589, %v588
  %v591 = vmul.f32 0.5, %v590
  %v592 = vsub.f32 1.5, %v591
  %v593 = vmul.f32 %v588, %v592
  %vm594 = vweird.f32 %v403
  %vm595 = vweird.f32 %v588
  %vm596 = vmor %vm594, %vm595
  %v597 = vsel %vm596, %v588, %v593
  %v598 = vrsqrt.pop %v404
  %v599 = vmul.f32 %v598, %v404
  %v600 = vmul.f32 %v599, %v598
  %v601 = vmul.f32 0.5, %v600
  %v602 = vsub.f32 1.5, %v601
  %v603 = vmul.f32 %v598, %v602
  %vm604 = vweird.f32 %v404
  %vm605 = vweird.f32 %v598
  %vm606 = vmor %vm604, %vm605
  %v607 = vsel %vm606, %v598, %v603
  %v608 = vrsqrt.pop %v405
  %v609 = vmul.f32 %v608, %v405
  %v610 = vmul.f32 %v609, %v608
  %v611 = vmul.f32 0.5, %v610
  %v612 = vsub.f32 1.5, %v611
  %v613 = vmul.f32 %v608, %v612
  %vm614 = vweird.f32 %v405
  %vm615 = vweird.f32 %v608
  %vm616 = vmor %vm614, %vm615
  %v617 = vsel %vm616, %v608, %v613
  %v618 = vrsqrt.pop %v406
  %v619 = vmul.f32 %v618, %v406
  %v620 = vmul.f32 %v619, %v618
  %v621 = vmul.f32 0.5, %v620
  %v622 = vsub.f32 1.5, %v621
  %v623 = vmul.f32 %v618, %v622
  %vm624 = vweird.f32 %v406
  %vm625 = vweird.f32 %v618
  %vm626 = vmor %vm624, %vm625
  %v627 = vsel %vm626, %v618, %v623
  %v628 = vrsqrt.pop %v407
  %v629 = vmul.f32 %v628, %v407
  %v630 = vmul.f32 %v629, %v628
  %v631 = vmul.f32 0.5, %v630
  %v632 = vsub.f32 1.5, %v631
  %v633 = vmul.f32 %v628, %v632
  %vm634 = vweird.f32 %v407
  %vm635 = vweird.f32 %v628
  %vm636 = vmor %vm634, %vm635
  %v637 = vsel %vm636, %v628, %v633
  %v638 = vrsqrt.pop %v408
  %v639 = vmul.f32 %v638, %v408
  %v640 = vmul.f32 %v639, %v638
  %v641 = vmul.f32 0.5, %v640
  %v642 = vsub.f32 1.5, %v641
  %v643 = vmul.f32 %v638, %v642
  %vm644 = vweird.f32 %v408
  %vm645 = vweird.f32 %v638
  %vm646 = vmor %vm644, %vm645
  %v647 = vsel %vm646, %v638, %v643
  %v648 = vrsqrt.pop %v409
  %v649 = vmul.f32 %v648, %v409
  %v650 = vmul.f32 %v649, %v648
  %v651 = vmul.f32 0.5, %v650
  %v652 = vsub.f32 1.5, %v651
  %v653 = vmul.f32 %v648, %v652
  %vm654 = vweird.f32 %v409
  %vm655 = vweird.f32 %v648
  %vm656 = vmor %vm654, %vm655
  %v657 = vsel %vm656, %v648, %v653
  %v658 = vrsqrt.pop %v410
  %v659 = vmul.f32 %v658, %v410
  %v660 = vmul.f32 %v659, %v658
  %v661 = vmul.f32 0.5, %v660
  %v662 = vsub.f32 1.5, %v661
  %v663 = vmul.f32 %v658, %v662
  %vm664 = vweird.f32 %v410
  %vm665 = vweird.f32 %v658
  %vm666 = vmor %vm664, %vm665
  %v667 = vsel %vm666, %v658, %v663
  %v668 = vrsqrt.pop %v411
  %v669 = vmul.f32 %v668, %v411
  %v670 = vmul.f32 %v669, %v668
  %v671 = vmul.f32 0.5, %v670
  %v672 = vsub.f32 1.5, %v671
  %v673 = vmul.f32 %v668, %v672
  %vm674 = vweird.f32 %v411
  %vm675 = vweird.f32 %v668
  %vm676 = vmor %vm674, %vm675
  %v677 = vsel %vm676, %v668, %v673
  %v678 = vrsqrt.pop %v412
  %v679 = vmul.f32 %v678, %v412
  %v680 = vmul.f32 %v679, %v678
  %v681 = vmul.f32 0.5, %v680
  %v682 = vsub.f32 1.5, %v681
  %v683 = vmul.f32 %v678, %v682
  %vm684 = vweird.f32 %v412
  %vm685 = vweird.f32 %v678
  %vm686 = vmor %vm684, %vm685
  %v687 = vsel %vm686, %v678, %v683
  %v688 = vrsqrt.pop %v413
  %v689 = vmul.f32 %v688, %v413
  %v690 = vmul.f32 %v689, %v688
  %v691 = vmul.f32 0.5, %v690
  %v692 = vsub.f32 1.5, %v691
  %v693 = vmul.f32 %v688, %v692
  %vm694 = vweird.f32 %v413
  %vm695 = vweird.f32 %v688
  %vm696 = vmor %vm694, %vm695
  %v697 = vsel %vm696, %v688, %v693
  %v698 = vrsqrt.pop %v414
  %v699 = vmul.f32 %v698, %v414
  %v700 = vmul.f32 %v699, %v698
  %v701 = vmul.f32 0.5, %v700
  %v702 = vsub.f32 1.5, %v701
  %v703 = vmul.f32 %v698, %v702
  %vm704 = vweird.f32 %v414
  %vm705 = vweird.f32 %v698
  %vm706 = vmor %vm704, %vm705
  %v707 = vsel %vm706, %v698, %v703
  %v708 = vrsqrt.pop %v415
  %v709 = vmul.f32 %v708, %v415
  %v710 = vmul.f32 %v709, %v708
  %v711 = vmul.f32 0.5, %v710
  %v712 = vsub.f32 1.5, %v711
  %v713 = vmul.f32 %v708, %v712
  %vm714 = vweird.f32 %v415
  %vm715 = vweird.f32 %v708
  %vm716 = vmor %vm714, %vm715
  %v717 = vsel %vm716, %v708, %v713
  %v718 = vrsqrt.pop %v416
  %v719 = vmul.f32 %v718, %v416
  %v720 = vmul.f32 %v719, %v718
  %v721 = vmul.f32 0.5, %v720
  %v722 = vsub.f32 1.5, %v721
  %v723 = vmul.f32 %v718, %v722
  %vm724 = vweird.f32 %v416
  %vm725 = vweird.f32 %v718
  %vm726 = vmor %vm724, %vm725
  %v727 = vsel %vm726, %v718, %v723
  %v728 = vrsqrt.pop %v417
  %v729 = vmul.f32 %v728, %v417
  %v730 = vmul.f32 %v729, %v728
  %v731 = vmul.f32 0.5, %v730
  %v732 = vsub.f32 1.5, %v731
  %v733 = vmul.f32 %v728, %v732
  %vm734 = vweird.f32 %v417
  %vm735 = vweird.f32 %v728
  %vm736 = vmor %vm734, %vm735
  %v737 = vsel %vm736, %v728, %v733
  %v738 = vmul.f32 %v194, %v427
  %v739 = vmul.f32 %v195, %v437
  %v740 = vmul.f32 %v196, %v447
  %v741 = vmul.f32 %v197, %v457
  %v742 = vmul.f32 %v198, %v467
  %v743 = vmul.f32 %v199, %v477
  %v744 = vmul.f32 %v200, %v487
  %v745 = vmul.f32 %v201, %v497
  %v746 = vmul.f32 %v202, %v507
  %v747 = vmul.f32 %v203, %v517
  %v748 = vmul.f32 %v204, %v527
  %v749 = vmul.f32 %v205, %v537
  %v750 = vmul.f32 %v206, %v547
  %v751 = vmul.f32 %v207, %v557
  %v752 = vmul.f32 %v208, %v567
  %v753 = vmul.f32 %v209, %v577
  %v754 = vmul.f32 %v210, %v587
  %v755 = vmul.f32 %v211, %v597
  %v756 = vmul.f32 %v212, %v607
  %v757 = vmul.f32 %v213, %v617
  %v758 = vmul.f32 %v214, %v627
  %v759 = vmul.f32 %v215, %v637
  %v760 = vmul.f32 %v216, %v647
  %v761 = vmul.f32 %v217, %v657
  %v762 = vmul.f32 %v218, %v667
  %v763 = vmul.f32 %v219, %v677
  %v764 = vmul.f32 %v220, %v687
  %v765 = vmul.f32 %v221, %v697
  %v766 = vmul.f32 %v222, %v707
  %v767 = vmul.f32 %v223, %v717
  %v768 = vmul.f32 %v224, %v727
  %v769 = vmul.f32 %v225, %v737
  %v770 = vld [vmem:[%s1] sm:$0x1]
  %v772 = vperm.slane %v770, 0
  %v774 = vmul.f32 %v738, %v772
  %v775 = vmul.f32 %v739, %v772
  %v776 = vmul.f32 %v740, %v772
  %v777 = vmul.f32 %v741, %v772
  %v778 = vmul.f32 %v742, %v772
  %v779 = vmul.f32 %v743, %v772
  %v780 = vmul.f32 %v744, %v772
  %v781 = vmul.f32 %v745, %v772
  %v782 = vmul.f32 %v746, %v772
  %v783 = vmul.f32 %v747, %v772
  %v784 = vmul.f32 %v748, %v772
  %v785 = vmul.f32 %v749, %v772
  %v786 = vmul.f32 %v750, %v772
  %v787 = vmul.f32 %v751, %v772
  %v788 = vmul.f32 %v752, %v772
  %v789 = vmul.f32 %v753, %v772
  %v790 = vmul.f32 %v754, %v772
  %v791 = vmul.f32 %v755, %v772
  %v792 = vmul.f32 %v756, %v772
  %v793 = vmul.f32 %v757, %v772
  %v794 = vmul.f32 %v758, %v772
  %v795 = vmul.f32 %v759, %v772
  %v796 = vmul.f32 %v760, %v772
  %v797 = vmul.f32 %v761, %v772
  %v798 = vmul.f32 %v762, %v772
  %v799 = vmul.f32 %v763, %v772
  %v800 = vmul.f32 %v764, %v772
  %v801 = vmul.f32 %v765, %v772
  %v802 = vmul.f32 %v766, %v772
  %v803 = vmul.f32 %v767, %v772
  %v804 = vmul.f32 %v768, %v772
  %v805 = vmul.f32 %v769, %v772
  %v806 = vld [vmem:[%s2] sm:$0x1]
  %v808 = vperm.slane %v806, 0
  %v810 = vadd.f32 %v774, %v808
  %v811 = vadd.f32 %v775, %v808
  %v812 = vadd.f32 %v776, %v808
  %v813 = vadd.f32 %v777, %v808
  %v814 = vadd.f32 %v778, %v808
  %v815 = vadd.f32 %v779, %v808
  %v816 = vadd.f32 %v780, %v808
  %v817 = vadd.f32 %v781, %v808
  %v818 = vadd.f32 %v782, %v808
  %v819 = vadd.f32 %v783, %v808
  %v820 = vadd.f32 %v784, %v808
  %v821 = vadd.f32 %v785, %v808
  %v822 = vadd.f32 %v786, %v808
  %v823 = vadd.f32 %v787, %v808
  %v824 = vadd.f32 %v788, %v808
  %v825 = vadd.f32 %v789, %v808
  %v826 = vadd.f32 %v790, %v808
  %v827 = vadd.f32 %v791, %v808
  %v828 = vadd.f32 %v792, %v808
  %v829 = vadd.f32 %v793, %v808
  %v830 = vadd.f32 %v794, %v808
  %v831 = vadd.f32 %v795, %v808
  %v832 = vadd.f32 %v796, %v808
  %v833 = vadd.f32 %v797, %v808
  %v834 = vadd.f32 %v798, %v808
  %v835 = vadd.f32 %v799, %v808
  %v836 = vadd.f32 %v800, %v808
  %v837 = vadd.f32 %v801, %v808
  %v838 = vadd.f32 %v802, %v808
  %v839 = vadd.f32 %v803, %v808
  %v840 = vadd.f32 %v804, %v808
  %v841 = vadd.f32 %v805, %v808
  %v842 = vld [vmem:[%s3] sm:$0xff]
  %v843 = vld [vmem:[%s3 + $0x8] sm:$0xff]
  %v844 = vld [vmem:[%s3 + $0x10] sm:$0xff]
  %v845 = vld [vmem:[%s3 + $0x18] sm:$0xff]
  %v846 = vld [vmem:[%s4] sm:$0x1]
  %v848 = vperm.slane %v846, 0
  %v851 = vsel %vm58, %v810, 0
  %v854 = vsel %vm58, %v811, 0
  %v857 = vsel %vm58, %v812, 0
  %v860 = vsel %vm58, %v813, 0
  %v863 = vsel %vm58, %v814, 0
  %v866 = vsel %vm58, %v815, 0
  %v869 = vsel %vm58, %v816, 0
  %v872 = vsel %vm58, %v817, 0
  %v875 = vsel %vm58, %v818, 0
  %v878 = vsel %vm58, %v819, 0
  %v881 = vsel %vm58, %v820, 0
  %v884 = vsel %vm58, %v821, 0
  %v887 = vsel %vm58, %v822, 0
  %v890 = vsel %vm58, %v823, 0
  %v893 = vsel %vm58, %v824, 0
  %v896 = vsel %vm58, %v825, 0
  %v899 = vsel %vm58, %v826, 0
  %v902 = vsel %vm58, %v827, 0
  %v905 = vsel %vm58, %v828, 0
  %v908 = vsel %vm58, %v829, 0
  %v911 = vsel %vm58, %v830, 0
  %v914 = vsel %vm58, %v831, 0
  %v917 = vsel %vm58, %v832, 0
  %v920 = vsel %vm58, %v833, 0
  %v923 = vsel %vm58, %v834, 0
  %v926 = vsel %vm58, %v835, 0
  %v929 = vsel %vm58, %v836, 0
  %v932 = vsel %vm58, %v837, 0
  %v935 = vsel %vm58, %v838, 0
  %v938 = vsel %vm58, %v839, 0
  %v941 = vsel %vm58, %v840, 0
  %v944 = vsel %vm58, %v841, 0
  %946 = vmatpush.msra.mxu0 0.0
  %947 = vmatpush.msra.mxu0 0.0
  %948 = vmatpush.msra.mxu0 0.0
  %949 = vmatpush.msra.mxu0 0.0
  %950 = vmatpush.msra.mxu0 0.0
  %951 = vmatpush.msra.mxu0 0.0
  %952 = vmatpush.msra.mxu0 0.0
  %953 = vmatpush.msra.mxu0 0.0
  %954 = vmatpush.msra.mxu0 0.0
  %955 = vmatpush.msra.mxu0 0.0
  %956 = vmatpush.msra.mxu0 0.0
  %957 = vmatpush.msra.mxu0 0.0
  %958 = vmatpush.msra.mxu0 %v845
  %959 = vmatpush.msra.mxu0 %v844
  %960 = vmatpush.msra.mxu0 %v843
  %961 = vmatpush.msra.mxu0 %v842
  %962 = vmatmul.f32.gmra.mxu0 %v851
  %v963 = vpop.f32.mrf.mxu0
  %v964 = vadd.f32 %v848, %v963
  %965 = vmatmul.f32.gmra.mxu0 %v854
  %v966 = vpop.f32.mrf.mxu0
  %v967 = vadd.f32 %v848, %v966
  %968 = vmatmul.f32.gmra.mxu0 %v857
  %v969 = vpop.f32.mrf.mxu0
  %v970 = vadd.f32 %v848, %v969
  %971 = vmatmul.f32.gmra.mxu0 %v860
  %v972 = vpop.f32.mrf.mxu0
  %v973 = vadd.f32 %v848, %v972
  %974 = vmatmul.f32.gmra.mxu0 %v863
  %v975 = vpop.f32.mrf.mxu0
  %v976 = vadd.f32 %v848, %v975
  %977 = vmatmul.f32.gmra.mxu0 %v866
  %v978 = vpop.f32.mrf.mxu0
  %v979 = vadd.f32 %v848, %v978
  %980 = vmatmul.f32.gmra.mxu0 %v869
  %v981 = vpop.f32.mrf.mxu0
  %v982 = vadd.f32 %v848, %v981
  %983 = vmatmul.f32.gmra.mxu0 %v872
  %v984 = vpop.f32.mrf.mxu0
  %v985 = vadd.f32 %v848, %v984
  %986 = vmatmul.f32.gmra.mxu0 %v875
  %v987 = vpop.f32.mrf.mxu0
  %v988 = vadd.f32 %v848, %v987
  %989 = vmatmul.f32.gmra.mxu0 %v878
  %v990 = vpop.f32.mrf.mxu0
  %v991 = vadd.f32 %v848, %v990
  %992 = vmatmul.f32.gmra.mxu0 %v881
  %v993 = vpop.f32.mrf.mxu0
  %v994 = vadd.f32 %v848, %v993
  %995 = vmatmul.f32.gmra.mxu0 %v884
  %v996 = vpop.f32.mrf.mxu0
  %v997 = vadd.f32 %v848, %v996
  %998 = vmatmul.f32.gmra.mxu0 %v887
  %v999 = vpop.f32.mrf.mxu0
  %v1000 = vadd.f32 %v848, %v999
  %1001 = vmatmul.f32.gmra.mxu0 %v890
  %v1002 = vpop.f32.mrf.mxu0
  %v1003 = vadd.f32 %v848, %v1002
  %1004 = vmatmul.f32.gmra.mxu0 %v893
  %v1005 = vpop.f32.mrf.mxu0
  %v1006 = vadd.f32 %v848, %v1005
  %1007 = vmatmul.f32.gmra.mxu0 %v896
  %v1008 = vpop.f32.mrf.mxu0
  %v1009 = vadd.f32 %v848, %v1008
  %1010 = vmatmul.f32.gmra.mxu0 %v899
  %v1011 = vpop.f32.mrf.mxu0
  %v1012 = vadd.f32 %v848, %v1011
  %1013 = vmatmul.f32.gmra.mxu0 %v902
  %v1014 = vpop.f32.mrf.mxu0
  %v1015 = vadd.f32 %v848, %v1014
  %1016 = vmatmul.f32.gmra.mxu0 %v905
  %v1017 = vpop.f32.mrf.mxu0
  %v1018 = vadd.f32 %v848, %v1017
  %1019 = vmatmul.f32.gmra.mxu0 %v908
  %v1020 = vpop.f32.mrf.mxu0
  %v1021 = vadd.f32 %v848, %v1020
  %1022 = vmatmul.f32.gmra.mxu0 %v911
  %v1023 = vpop.f32.mrf.mxu0
  %v1024 = vadd.f32 %v848, %v1023
  %1025 = vmatmul.f32.gmra.mxu0 %v914
  %v1026 = vpop.f32.mrf.mxu0
  %v1027 = vadd.f32 %v848, %v1026
  %1028 = vmatmul.f32.gmra.mxu0 %v917
  %v1029 = vpop.f32.mrf.mxu0
  %v1030 = vadd.f32 %v848, %v1029
  %1031 = vmatmul.f32.gmra.mxu0 %v920
  %v1032 = vpop.f32.mrf.mxu0
  %v1033 = vadd.f32 %v848, %v1032
  %1034 = vmatmul.f32.gmra.mxu0 %v923
  %v1035 = vpop.f32.mrf.mxu0
  %v1036 = vadd.f32 %v848, %v1035
  %1037 = vmatmul.f32.gmra.mxu0 %v926
  %v1038 = vpop.f32.mrf.mxu0
  %v1039 = vadd.f32 %v848, %v1038
  %1040 = vmatmul.f32.gmra.mxu0 %v929
  %v1041 = vpop.f32.mrf.mxu0
  %v1042 = vadd.f32 %v848, %v1041
  %1043 = vmatmul.f32.gmra.mxu0 %v932
  %v1044 = vpop.f32.mrf.mxu0
  %v1045 = vadd.f32 %v848, %v1044
  %1046 = vmatmul.f32.gmra.mxu0 %v935
  %v1047 = vpop.f32.mrf.mxu0
  %v1048 = vadd.f32 %v848, %v1047
  %1049 = vmatmul.f32.gmra.mxu0 %v938
  %v1050 = vpop.f32.mrf.mxu0
  %v1051 = vadd.f32 %v848, %v1050
  %1052 = vmatmul.f32.gmra.mxu0 %v941
  %v1053 = vpop.f32.mrf.mxu0
  %v1054 = vadd.f32 %v848, %v1053
  %1055 = vmatmul.f32.gmra.mxu0 %v944
  %v1056 = vpop.f32.mrf.mxu0
  %v1057 = vadd.f32 %v848, %v1056
  %1058 = vdwg.mxu0
  %v1059 = vmax.f32 %v964, 0.0
  %v1060 = vmax.f32 %v967, 0.0
  %v1061 = vmax.f32 %v970, 0.0
  %v1062 = vmax.f32 %v973, 0.0
  %v1063 = vmax.f32 %v976, 0.0
  %v1064 = vmax.f32 %v979, 0.0
  %v1065 = vmax.f32 %v982, 0.0
  %v1066 = vmax.f32 %v985, 0.0
  %v1067 = vmax.f32 %v988, 0.0
  %v1068 = vmax.f32 %v991, 0.0
  %v1069 = vmax.f32 %v994, 0.0
  %v1070 = vmax.f32 %v997, 0.0
  %v1071 = vmax.f32 %v1000, 0.0
  %v1072 = vmax.f32 %v1003, 0.0
  %v1073 = vmax.f32 %v1006, 0.0
  %v1074 = vmax.f32 %v1009, 0.0
  %v1075 = vmax.f32 %v1012, 0.0
  %v1076 = vmax.f32 %v1015, 0.0
  %v1077 = vmax.f32 %v1018, 0.0
  %v1078 = vmax.f32 %v1021, 0.0
  %v1079 = vmax.f32 %v1024, 0.0
  %v1080 = vmax.f32 %v1027, 0.0
  %v1081 = vmax.f32 %v1030, 0.0
  %v1082 = vmax.f32 %v1033, 0.0
  %v1083 = vmax.f32 %v1036, 0.0
  %v1084 = vmax.f32 %v1039, 0.0
  %v1085 = vmax.f32 %v1042, 0.0
  %v1086 = vmax.f32 %v1045, 0.0
  %v1087 = vmax.f32 %v1048, 0.0
  %v1088 = vmax.f32 %v1051, 0.0
  %v1089 = vmax.f32 %v1054, 0.0
  %v1090 = vmax.f32 %v1057, 0.0
  %v1091 = vld [vmem:[%s5] sm:$0xff]
  %v1092 = vld [vmem:[%s5 + $0x8] sm:$0xff]
  %v1093 = vld [vmem:[%s5 + $0x10] sm:$0xff]
  %v1094 = vld [vmem:[%s5 + $0x18] sm:$0xff]
  %v1095 = vld [vmem:[%s5 + $0x20] sm:$0xff]
  %v1096 = vld [vmem:[%s5 + $0x28] sm:$0xff]
  %v1097 = vld [vmem:[%s5 + $0x30] sm:$0xff]
  %v1098 = vld [vmem:[%s5 + $0x38] sm:$0xff]
  %v1099 = vld [vmem:[%s5 + $0x40] sm:$0xff]
  %v1100 = vld [vmem:[%s5 + $0x48] sm:$0xff]
  %v1101 = vld [vmem:[%s5 + $0x50] sm:$0xff]
  %v1102 = vld [vmem:[%s5 + $0x58] sm:$0xff]
  %v1103 = vld [vmem:[%s5 + $0x60] sm:$0xff]
  %v1104 = vld [vmem:[%s5 + $0x68] sm:$0xff]
  %v1105 = vld [vmem:[%s5 + $0x70] sm:$0xff]
  %v1106 = vld [vmem:[%s5 + $0x78] sm:$0xff]
  %v1107 = vld [vmem:[%s6] sm:$0x1]
  %v1109 = vperm.slane %v1107, 0
  %1111 = vmatpush.msra.mxu0 %v1106
  %1112 = vmatpush.msra.mxu0 %v1105
  %1113 = vmatpush.msra.mxu0 %v1104
  %1114 = vmatpush.msra.mxu0 %v1103
  %1115 = vmatpush.msra.mxu0 %v1102
  %1116 = vmatpush.msra.mxu0 %v1101
  %1117 = vmatpush.msra.mxu0 %v1100
  %1118 = vmatpush.msra.mxu0 %v1099
  %1119 = vmatpush.msra.mxu0 %v1098
  %1120 = vmatpush.msra.mxu0 %v1097
  %1121 = vmatpush.msra.mxu0 %v1096
  %1122 = vmatpush.msra.mxu0 %v1095
  %1123 = vmatpush.msra.mxu0 %v1094
  %1124 = vmatpush.msra.mxu0 %v1093
  %1125 = vmatpush.msra.mxu0 %v1092
  %1126 = vmatpush.msra.mxu0 %v1091
  %1127 = vmatmul.f32.gmra.mxu0 %v1059
  %v1128 = vpop.f32.mrf.mxu0
  %v1129 = vadd.f32 %v1109, %v1128
  %1130 = vmatmul.f32.gmra.mxu0 %v1060
  %v1131 = vpop.f32.mrf.mxu0
  %v1132 = vadd.f32 %v1109, %v1131
  %1133 = vmatmul.f32.gmra.mxu0 %v1061
  %v1134 = vpop.f32.mrf.mxu0
  %v1135 = vadd.f32 %v1109, %v1134
  %1136 = vmatmul.f32.gmra.mxu0 %v1062
  %v1137 = vpop.f32.mrf.mxu0
  %v1138 = vadd.f32 %v1109, %v1137
  %1139 = vmatmul.f32.gmra.mxu0 %v1063
  %v1140 = vpop.f32.mrf.mxu0
  %v1141 = vadd.f32 %v1109, %v1140
  %1142 = vmatmul.f32.gmra.mxu0 %v1064
  %v1143 = vpop.f32.mrf.mxu0
  %v1144 = vadd.f32 %v1109, %v1143
  %1145 = vmatmul.f32.gmra.mxu0 %v1065
  %v1146 = vpop.f32.mrf.mxu0
  %v1147 = vadd.f32 %v1109, %v1146
  %1148 = vmatmul.f32.gmra.mxu0 %v1066
  %v1149 = vpop.f32.mrf.mxu0
  %v1150 = vadd.f32 %v1109, %v1149
  %1151 = vmatmul.f32.gmra.mxu0 %v1067
  %v1152 = vpop.f32.mrf.mxu0
  %v1153 = vadd.f32 %v1109, %v1152
  %1154 = vmatmul.f32.gmra.mxu0 %v1068
  %v1155 = vpop.f32.mrf.mxu0
  %v1156 = vadd.f32 %v1109, %v1155
  %1157 = vmatmul.f32.gmra.mxu0 %v1069
  %v1158 = vpop.f32.mrf.mxu0
  %v1159 = vadd.f32 %v1109, %v1158
  %1160 = vmatmul.f32.gmra.mxu0 %v1070
  %v1161 = vpop.f32.mrf.mxu0
  %v1162 = vadd.f32 %v1109, %v1161
  %1163 = vmatmul.f32.gmra.mxu0 %v1071
  %v1164 = vpop.f32.mrf.mxu0
  %v1165 = vadd.f32 %v1109, %v1164
  %1166 = vmatmul.f32.gmra.mxu0 %v1072
  %v1167 = vpop.f32.mrf.mxu0
  %v1168 = vadd.f32 %v1109, %v1167
  %1169 = vmatmul.f32.gmra.mxu0 %v1073
  %v1170 = vpop.f32.mrf.mxu0
  %v1171 = vadd.f32 %v1109, %v1170
  %1172 = vmatmul.f32.gmra.mxu0 %v1074
  %v1173 = vpop.f32.mrf.mxu0
  %v1174 = vadd.f32 %v1109, %v1173
  %1175 = vmatmul.f32.gmra.mxu0 %v1075
  %v1176 = vpop.f32.mrf.mxu0
  %v1177 = vadd.f32 %v1109, %v1176
  %1178 = vmatmul.f32.gmra.mxu0 %v1076
  %v1179 = vpop.f32.mrf.mxu0
  %v1180 = vadd.f32 %v1109, %v1179
  %1181 = vmatmul.f32.gmra.mxu0 %v1077
  %v1182 = vpop.f32.mrf.mxu0
  %v1183 = vadd.f32 %v1109, %v1182
  %1184 = vmatmul.f32.gmra.mxu0 %v1078
  %v1185 = vpop.f32.mrf.mxu0
  %v1186 = vadd.f32 %v1109, %v1185
  %1187 = vmatmul.f32.gmra.mxu0 %v1079
  %v1188 = vpop.f32.mrf.mxu0
  %v1189 = vadd.f32 %v1109, %v1188
  %1190 = vmatmul.f32.gmra.mxu0 %v1080
  %v1191 = vpop.f32.mrf.mxu0
  %v1192 = vadd.f32 %v1109, %v1191
  %1193 = vmatmul.f32.gmra.mxu0 %v1081
  %v1194 = vpop.f32.mrf.mxu0
  %v1195 = vadd.f32 %v1109, %v1194
  %1196 = vmatmul.f32.gmra.mxu0 %v1082
  %v1197 = vpop.f32.mrf.mxu0
  %v1198 = vadd.f32 %v1109, %v1197
  %1199 = vmatmul.f32.gmra.mxu0 %v1083
  %v1200 = vpop.f32.mrf.mxu0
  %v1201 = vadd.f32 %v1109, %v1200
  %1202 = vmatmul.f32.gmra.mxu0 %v1084
  %v1203 = vpop.f32.mrf.mxu0
  %v1204 = vadd.f32 %v1109, %v1203
  %1205 = vmatmul.f32.gmra.mxu0 %v1085
  %v1206 = vpop.f32.mrf.mxu0
  %v1207 = vadd.f32 %v1109, %v1206
  %1208 = vmatmul.f32.gmra.mxu0 %v1086
  %v1209 = vpop.f32.mrf.mxu0
  %v1210 = vadd.f32 %v1109, %v1209
  %1211 = vmatmul.f32.gmra.mxu0 %v1087
  %v1212 = vpop.f32.mrf.mxu0
  %v1213 = vadd.f32 %v1109, %v1212
  %1214 = vmatmul.f32.gmra.mxu0 %v1088
  %v1215 = vpop.f32.mrf.mxu0
  %v1216 = vadd.f32 %v1109, %v1215
  %1217 = vmatmul.f32.gmra.mxu0 %v1089
  %v1218 = vpop.f32.mrf.mxu0
  %v1219 = vadd.f32 %v1109, %v1218
  %1220 = vmatmul.f32.gmra.mxu0 %v1090
  %v1221 = vpop.f32.mrf.mxu0
  %v1222 = vadd.f32 %v1109, %v1221
  %1223 = vdwg.mxu0
  %v1224 = vadd.f32 %v26, %v1129
  %v1225 = vadd.f32 %v27, %v1132
  %v1226 = vadd.f32 %v28, %v1135
  %v1227 = vadd.f32 %v29, %v1138
  %v1228 = vadd.f32 %v30, %v1141
  %v1229 = vadd.f32 %v31, %v1144
  %v1230 = vadd.f32 %v32, %v1147
  %v1231 = vadd.f32 %v33, %v1150
  %v1232 = vadd.f32 %v34, %v1153
  %v1233 = vadd.f32 %v35, %v1156
  %v1234 = vadd.f32 %v36, %v1159
  %v1235 = vadd.f32 %v37, %v1162
  %v1236 = vadd.f32 %v38, %v1165
  %v1237 = vadd.f32 %v39, %v1168
  %v1238 = vadd.f32 %v40, %v1171
  %v1239 = vadd.f32 %v41, %v1174
  %v1240 = vadd.f32 %v42, %v1177
  %v1241 = vadd.f32 %v43, %v1180
  %v1242 = vadd.f32 %v44, %v1183
  %v1243 = vadd.f32 %v45, %v1186
  %v1244 = vadd.f32 %v46, %v1189
  %v1245 = vadd.f32 %v47, %v1192
  %v1246 = vadd.f32 %v48, %v1195
  %v1247 = vadd.f32 %v49, %v1198
  %v1248 = vadd.f32 %v50, %v1201
  %v1249 = vadd.f32 %v51, %v1204
  %v1250 = vadd.f32 %v52, %v1207
  %v1251 = vadd.f32 %v53, %v1210
  %v1252 = vadd.f32 %v54, %v1213
  %v1253 = vadd.f32 %v55, %v1216
  %v1254 = vadd.f32 %v56, %v1219
  %v1255 = vadd.f32 %v57, %v1222
  %1256 = vst.msk [vmem:[%s7] sm:$0xff] %vm58, %v1224
  %1257 = vst.msk [vmem:[%s7 + $0x8] sm:$0xff] %vm58, %v1225
  %1258 = vst.msk [vmem:[%s7 + $0x10] sm:$0xff] %vm58, %v1226
  %1259 = vst.msk [vmem:[%s7 + $0x18] sm:$0xff] %vm58, %v1227
  %1260 = vst.msk [vmem:[%s7 + $0x20] sm:$0xff] %vm58, %v1228
  %1261 = vst.msk [vmem:[%s7 + $0x28] sm:$0xff] %vm58, %v1229
  %1262 = vst.msk [vmem:[%s7 + $0x30] sm:$0xff] %vm58, %v1230
  %1263 = vst.msk [vmem:[%s7 + $0x38] sm:$0xff] %vm58, %v1231
  %1264 = vst.msk [vmem:[%s7 + $0x40] sm:$0xff] %vm58, %v1232
  %1265 = vst.msk [vmem:[%s7 + $0x48] sm:$0xff] %vm58, %v1233
  %1266 = vst.msk [vmem:[%s7 + $0x50] sm:$0xff] %vm58, %v1234
  %1267 = vst.msk [vmem:[%s7 + $0x58] sm:$0xff] %vm58, %v1235
  %1268 = vst.msk [vmem:[%s7 + $0x60] sm:$0xff] %vm58, %v1236
  %1269 = vst.msk [vmem:[%s7 + $0x68] sm:$0xff] %vm58, %v1237
  %1270 = vst.msk [vmem:[%s7 + $0x70] sm:$0xff] %vm58, %v1238
  %1271 = vst.msk [vmem:[%s7 + $0x78] sm:$0xff] %vm58, %v1239
  %1272 = vst.msk [vmem:[%s7 + $0x80] sm:$0xff] %vm58, %v1240
  %1273 = vst.msk [vmem:[%s7 + $0x88] sm:$0xff] %vm58, %v1241
  %1274 = vst.msk [vmem:[%s7 + $0x90] sm:$0xff] %vm58, %v1242
  %1275 = vst.msk [vmem:[%s7 + $0x98] sm:$0xff] %vm58, %v1243
  %1276 = vst.msk [vmem:[%s7 + $0xa0] sm:$0xff] %vm58, %v1244
  %1277 = vst.msk [vmem:[%s7 + $0xa8] sm:$0xff] %vm58, %v1245
  %1278 = vst.msk [vmem:[%s7 + $0xb0] sm:$0xff] %vm58, %v1246
  %1279 = vst.msk [vmem:[%s7 + $0xb8] sm:$0xff] %vm58, %v1247
  %1280 = vst.msk [vmem:[%s7 + $0xc0] sm:$0xff] %vm58, %v1248
  %1281 = vst.msk [vmem:[%s7 + $0xc8] sm:$0xff] %vm58, %v1249
  %1282 = vst.msk [vmem:[%s7 + $0xd0] sm:$0xff] %vm58, %v1250
  %1283 = vst.msk [vmem:[%s7 + $0xd8] sm:$0xff] %vm58, %v1251
  %1284 = vst.msk [vmem:[%s7 + $0xe0] sm:$0xff] %vm58, %v1252
  %1285 = vst.msk [vmem:[%s7 + $0xe8] sm:$0xff] %vm58, %v1253
  %1286 = vst.msk [vmem:[%s7 + $0xf0] sm:$0xff] %vm58, %v1254
  %1287 = vst.msk [vmem:[%s7 + $0xf8] sm:$0xff] %vm58, %v1255
  // Predicated region
  $region30: #{tpu_custom_call.1} parent=0 // pred_check
    _
  $region31: #{tpu_custom_call.1} parent=0 // pred_check_branch
    %1289 = sbr.rel (0) target = $region33
  $region32: #{tpu_custom_call.1} parent=0 // pred_region
    _
  $region33: #{tpu_custom_call.1} parent=0 // pred_fallthru
    _
  // Predicated region
  $region34: #{tpu_custom_call.1} parent=0 // pred_check
    _
  $region35: #{tpu_custom_call.1} parent=0 // pred_check_branch
    %1291 = sbr.rel (0) target = $region37
  $region36: #{tpu_custom_call.1} parent=0 // pred_region
    _
  $region37: #{tpu_custom_call.1} parent=0 // pred_fallthru
    _

</llo_original>
